<compile_context>
chip_gen: v7x
topology: tpu7x:2x2x1
jax: 0.10.0
libtpu: 0.0.40
codegen_flags: <defaults>
</compile_context>

<pallas_src>
import math

import jax
import jax.numpy as jnp
import numpy as np
from jax import lax
from jax.experimental import pallas as pl
from jax.experimental.pallas import tpu as pltpu

# ---------------- configuration (small, consistent with the module) ----------
D_MODEL = 32          # d_model
H_Q = 4               # query heads
H_KV = 2              # kv heads (GQA)
D_HEAD = D_MODEL // H_Q
D_Q = D_MODEL
D_KV = H_KV * D_HEAD
D_QK = D_Q + D_KV     # width of the fused q|k projection slab (48)
G = H_Q // H_KV
N_POSITION = 100
B = 2                 # batch
S = 8                 # sequence length
D_QKV = (H_Q + 2 * H_KV) * D_HEAD
BS = B * S


# ---------------- Pallas kernel ----------------------------------------------
def mhsa_kernel(x_ref, wqk_ref, wvo_ref, rot_ref, cos_ref, sin_ref, mask_ref, o_ref):
    x = x_ref[...].astype(jnp.bfloat16)                       # (BS, D_MODEL)

    # --- fused projections (2 matmuls, lane-dense weight slabs) ---------------
    qk = jnp.dot(x, wqk_ref[...], preferred_element_type=jnp.float32)    # (BS, 48) f32
    u = jnp.dot(x, wvo_ref[...], preferred_element_type=jnp.float32)     # (BS, 128) f32

    # --- RoPE on the whole q|k slab (scale already folded into q-lane cos/sin)
    rot_part = jnp.dot(qk.astype(jnp.bfloat16), rot_ref[...],
                       preferred_element_type=jnp.float32)               # (BS, 48) f32
    qk = qk * cos_ref[...] + rot_part * sin_ref[...]                     # f32 VPU math
    qk = qk.astype(jnp.bfloat16)
    u = u.astype(jnp.bfloat16)

    mask = mask_ref[...]                                      # (G*BS, BS) additive mask
    dn_scores = (((1,), (1,)), ((), ()))                      # contract feature dims (no .T)

    acc = jnp.zeros((BS, D_MODEL), jnp.float32)
    for g in range(H_KV):
        # G query heads of this kv group, sublane-stacked -> one score matmul
        q_stack = jnp.concatenate(
            [qk[:, (g * G + j) * D_HEAD:(g * G + j + 1) * D_HEAD] for j in range(G)],
            axis=0)                                                         # (G*BS, E)
        k_g = qk[:, D_Q + g * D_HEAD: D_Q + (g + 1) * D_HEAD]               # (BS, E)

        s = lax.dot_general(q_stack, k_g, dn_scores,
                            preferred_element_type=jnp.float32)             # (G*BS, BS)
        s = s + mask                                    # block off cross-batch keys
        s = s - jnp.max(s, axis=-1, keepdims=True)
        p = jnp.exp(s)
        p = p / jnp.sum(p, axis=-1, keepdims=True)      # exact reciprocal (EUP not binding)
        p = p.astype(jnp.bfloat16)

        for j in range(G):
            h = g * G + j
            acc = acc + jnp.dot(p[j * BS:(j + 1) * BS, :],
                                u[:, h * D_MODEL:(h + 1) * D_MODEL],
                                preferred_element_type=jnp.float32)          # (BS, D_MODEL)

    o_ref[...] = acc.astype(o_ref.dtype)                 # single (16,32) store


# ---------------- wrapper -----------------------------------------------------
def multi_head_self_attention(x, wqkv, wo, cos_base, sin_base):
    """x: (B, S, D_MODEL) f32. Returns (B, S, D_MODEL) f32."""
    # nn.Linear is y = x @ W.T ; split and lay out weights host-side.
    wq = wqkv[:D_Q]                       # (D_Q, D_MODEL)
    wk = wqkv[D_Q:D_Q + D_KV]             # (D_KV, D_MODEL)
    wv = wqkv[D_Q + D_KV:]                # (D_KV, D_MODEL)

    # fused lane-dense Q|K projection slab (32, 48)
    wqk = jnp.concatenate([wq.T, wk.T], axis=1).astype(jnp.bfloat16)

    # Wo folded into V: per query head h, VWo_h = Wv_{h//G}^T @ Wo_h  -> (32, 32),
    # stacked lane-dense as (32, 128).
    woT = wo.T                            # (D_MODEL concat-in, D_MODEL out)
    slabs = []
    for h in range(H_Q):
        g = h // G
        wv_gT = wv[g * D_HEAD:(g + 1) * D_HEAD].T      # (D_MODEL, E)
        wo_h = woT[h * D_HEAD:(h + 1) * D_HEAD]        # (E, D_MODEL)
        slabs.append(wv_gT @ wo_h)                     # (D_MODEL, D_MODEL) f32
    wvo = jnp.concatenate(slabs, axis=1).astype(jnp.bfloat16)   # (32, 128)

    # rotate_half as a bf16 block-diagonal +/-1 matrix over the 48-lane q|k slab.
    r = np.zeros((D_HEAD, D_HEAD), dtype=np.float32)
    for j in range(D_HEAD // 2):
        r[2 * j + 1, 2 * j] = -1.0
        r[2 * j, 2 * j + 1] = 1.0
    rot48 = np.zeros((D_QK, D_QK), dtype=np.float32)
    for hh in range(H_Q + H_KV):
        rot48[hh * D_HEAD:(hh + 1) * D_HEAD, hh * D_HEAD:(hh + 1) * D_HEAD] = r
    rot48 = jnp.asarray(rot48).astype(jnp.bfloat16)

    # cos/sin for the first S positions, tiled over batch and over all 6 head slots,
    # with the 1/sqrt(d_head) query scale folded into the q lanes (kept f32).
    scale = 1.0 / math.sqrt(D_HEAD)
    scale_row = jnp.concatenate([jnp.full((D_Q,), scale, jnp.float32),
                                 jnp.ones((D_KV,), jnp.float32)])
    cos48 = jnp.tile(jnp.tile(cos_base[:S], (B, 1)), (1, H_Q + H_KV)) * scale_row
    sin48 = jnp.tile(jnp.tile(sin_base[:S], (B, 1)), (1, H_Q + H_KV)) * scale_row

    # block-diagonal additive mask (batched scores; -1e30 kills cross-batch keys
    # BEFORE the row-max subtraction), tiled over the G sublane-stacked heads.
    bid = np.repeat(np.arange(B), S)
    blockdiag = np.where(bid[:, None] == bid[None, :], 0.0, -1e30).astype(np.float32)
    mask = jnp.asarray(np.tile(blockdiag, (G, 1)))               # (G*BS, BS)

    x2d = x.reshape(BS, D_MODEL)          # free metadata reshape outside the kernel

    out2d = pl.pallas_call(
        mhsa_kernel,
        out_shape=jax.ShapeDtypeStruct((BS, D_MODEL), jnp.float32),
        grid=(1,),                         # single invocation: whole problem in one step
        in_specs=[
            pl.BlockSpec((BS, D_MODEL), lambda i: (0, 0)),          # x (flattened)
            pl.BlockSpec((D_MODEL, D_QK), lambda i: (0, 0)),        # fused Wq|Wk
            pl.BlockSpec((D_MODEL, H_Q * D_MODEL), lambda i: (0, 0)),  # folded V@Wo
            pl.BlockSpec((D_QK, D_QK), lambda i: (0, 0)),           # rotate_half matrix
            pl.BlockSpec((BS, D_QK), lambda i: (0, 0)),             # cos (scale folded)
            pl.BlockSpec((BS, D_QK), lambda i: (0, 0)),             # sin (scale folded)
            pl.BlockSpec((G * BS, BS), lambda i: (0, 0)),           # block-diag mask
        ],
        out_specs=pl.BlockSpec((BS, D_MODEL), lambda i: (0, 0)),
        compiler_params=pltpu.CompilerParams(
            dimension_semantics=("arbitrary",)),
    )(x2d, wqk, wvo, rot48, cos48, sin48, mask)

    return out2d.reshape(B, S, D_MODEL)


# ---------------- pure-JAX reference (for correctness check) -----------------
def reference(x, wqkv, wo, cos_base, sin_base):
    qkv = x @ wqkv.T
    q = qkv[..., :D_Q].reshape(B, S, H_Q, D_HEAD)
    k = qkv[..., D_Q:D_Q + D_KV].reshape(B, S, H_KV, D_HEAD)
    v = qkv[..., D_Q + D_KV:].reshape(B, S, H_KV, D_HEAD)

    def rope(t):
        c = cos_base[:S][None, :, None, :]
        s = sin_base[:S][None, :, None, :]
        t1 = t[..., ::2]
        t2 = t[..., 1::2]
        rot = jnp.stack([-t2, t1], axis=-1).reshape(t.shape)
        return t * c + rot * s

    q = rope(q)
    k = rope(k)
    k = jnp.repeat(k, G, axis=2)
    v = jnp.repeat(v, G, axis=2)
    q = q.transpose(0, 2, 1, 3)
    k = k.transpose(0, 2, 1, 3)
    v = v.transpose(0, 2, 1, 3)
    s = (q @ k.transpose(0, 1, 3, 2)) / math.sqrt(D_HEAD)
    p = jax.nn.softmax(s, axis=-1)
    o = p @ v
    o = o.transpose(0, 2, 1, 3).reshape(B, S, D_MODEL)
    return o @ wo.T


# ---------------- main --------------------------------------------------------
if __name__ == "__main__":
    key = jax.random.PRNGKey(0)
    kx, kqkv, ko = jax.random.split(key, 3)

    x = jax.random.normal(kx, (B, S, D_MODEL), dtype=jnp.float32)
    # deterministic parameter init (synthetic; shapes follow nn.Linear(out, in))
    wqkv = jax.random.normal(kqkv, (D_QKV, D_MODEL), dtype=jnp.float32) * 0.05
    wo = jax.random.normal(ko, (D_MODEL, D_MODEL), dtype=jnp.float32) * 0.05

    # RotaryPositionEmbedding buffers
    theta = 1.0 / (10000.0 ** (jnp.arange(0, D_HEAD, 2, dtype=jnp.float32) / D_HEAD))
    theta = jnp.repeat(theta, 2)                              # repeat_interleave(2)
    ang = jnp.arange(N_POSITION, dtype=jnp.float32)[:, None] * theta[None, :]
    cos_base = jnp.cos(ang)                                   # (n_position, d_head)
    sin_base = jnp.sin(ang)

    out = multi_head_self_attention(x, wqkv, wo, cos_base, sin_base)
    out = jax.block_until_ready(out)

    ref = reference(x, wqkv, wo, cos_base, sin_base)
    # bf16 MXU inputs -> loosen tolerance vs. the f32 reference.
    np.testing.assert_allclose(np.asarray(out), np.asarray(ref), rtol=2e-2, atol=2e-2)

    print("KERNEL_OK")
</pallas_src>

<mosaic_0001>
module attributes {stable_mosaic.version = 11 : i64} {
  func.func @mhsa_kernel(%arg0: i32, %arg1: memref<16x32xf32, #tpu.memory_space<vmem>>, %arg2: memref<32x48xbf16, #tpu.memory_space<vmem>>, %arg3: memref<32x128xbf16, #tpu.memory_space<vmem>>, %arg4: memref<48x48xbf16, #tpu.memory_space<vmem>>, %arg5: memref<16x48xf32, #tpu.memory_space<vmem>>, %arg6: memref<16x48xf32, #tpu.memory_space<vmem>>, %arg7: memref<32x16xf32, #tpu.memory_space<vmem>>, %arg8: memref<16x32xf32, #tpu.memory_space<vmem>>) attributes {dimension_semantics = [#tpu.dimension_semantics<arbitrary>], iteration_bounds = array<i64: 1>, scalar_prefetch = 0 : i64, scratch_operands = 0 : i64, tpu.core_type = #tpu.core_type<tc>, window_params = [{pipeline_mode = #tpu.pipeline_mode<synchronous>, transform_indices = @transform_0, window_bounds = array<i64: 16, 32>}, {pipeline_mode = #tpu.pipeline_mode<synchronous>, transform_indices = @transform_1, window_bounds = array<i64: 32, 48>}, {pipeline_mode = #tpu.pipeline_mode<synchronous>, transform_indices = @transform_2, window_bounds = array<i64: 32, 128>}, {pipeline_mode = #tpu.pipeline_mode<synchronous>, transform_indices = @transform_3, window_bounds = array<i64: 48, 48>}, {pipeline_mode = #tpu.pipeline_mode<synchronous>, transform_indices = @transform_4, window_bounds = array<i64: 16, 48>}, {pipeline_mode = #tpu.pipeline_mode<synchronous>, transform_indices = @transform_5, window_bounds = array<i64: 16, 48>}, {pipeline_mode = #tpu.pipeline_mode<synchronous>, transform_indices = @transform_6, window_bounds = array<i64: 32, 16>}, {pipeline_mode = #tpu.pipeline_mode<synchronous>, transform_indices = @transform_7, window_bounds = array<i64: 16, 32>}]} {
    %c0 = arith.constant 0 : index
    %c0_0 = arith.constant 0 : index
    %0 = vector.load %arg1[%c0, %c0_0] : memref<16x32xf32, #tpu.memory_space<vmem>>, vector<16x32xf32>
    %1 = arith.truncf %0 : vector<16x32xf32> to vector<16x32xbf16>
    %c0_1 = arith.constant 0 : index
    %c0_2 = arith.constant 0 : index
    %2 = vector.load %arg2[%c0_1, %c0_2] : memref<32x48xbf16, #tpu.memory_space<vmem>>, vector<32x48xbf16>
    %cst = arith.constant dense<0.000000e+00> : vector<16x48xf32>
    %3 = tpu.matmul %1, %2, %cst {dimension_numbers = #tpu.dot_dimension_numbers<[1], [0], [0], [1], [0, 0, 1, 1], [], []>} : vector<16x32xbf16>, vector<32x48xbf16>, vector<16x48xf32> -> vector<16x48xf32>
    %c0_3 = arith.constant 0 : index
    %c0_4 = arith.constant 0 : index
    %4 = vector.load %arg3[%c0_3, %c0_4] : memref<32x128xbf16, #tpu.memory_space<vmem>>, vector<32x128xbf16>
    %cst_5 = arith.constant dense<0.000000e+00> : vector<16x128xf32>
    %5 = tpu.matmul %1, %4, %cst_5 {dimension_numbers = #tpu.dot_dimension_numbers<[1], [0], [0], [1], [0, 0, 1, 1], [], []>} : vector<16x32xbf16>, vector<32x128xbf16>, vector<16x128xf32> -> vector<16x128xf32>
    %6 = arith.truncf %3 : vector<16x48xf32> to vector<16x48xbf16>
    %c0_6 = arith.constant 0 : index
    %c0_7 = arith.constant 0 : index
    %7 = vector.load %arg4[%c0_6, %c0_7] : memref<48x48xbf16, #tpu.memory_space<vmem>>, vector<48x48xbf16>
    %cst_8 = arith.constant dense<0.000000e+00> : vector<16x48xf32>
    %8 = tpu.matmul %6, %7, %cst_8 {dimension_numbers = #tpu.dot_dimension_numbers<[1], [0], [0], [1], [0, 0, 1, 1], [], []>} : vector<16x48xbf16>, vector<48x48xbf16>, vector<16x48xf32> -> vector<16x48xf32>
    %c0_9 = arith.constant 0 : index
    %c0_10 = arith.constant 0 : index
    %9 = vector.load %arg5[%c0_9, %c0_10] : memref<16x48xf32, #tpu.memory_space<vmem>>, vector<16x48xf32>
    %10 = arith.mulf %3, %9 : vector<16x48xf32>
    %c0_11 = arith.constant 0 : index
    %c0_12 = arith.constant 0 : index
    %11 = vector.load %arg6[%c0_11, %c0_12] : memref<16x48xf32, #tpu.memory_space<vmem>>, vector<16x48xf32>
    %12 = arith.mulf %8, %11 : vector<16x48xf32>
    %13 = arith.addf %10, %12 : vector<16x48xf32>
    %14 = arith.truncf %13 : vector<16x48xf32> to vector<16x48xbf16>
    %15 = arith.truncf %5 : vector<16x128xf32> to vector<16x128xbf16>
    %c0_13 = arith.constant 0 : index
    %c0_14 = arith.constant 0 : index
    %16 = vector.load %arg7[%c0_13, %c0_14] : memref<32x16xf32, #tpu.memory_space<vmem>>, vector<32x16xf32>
    %cst_15 = arith.constant 0.000000e+00 : f32
    %17 = vector.broadcast %cst_15 : f32 to vector<16x32xf32>
    %18 = vector.extract_strided_slice %14 {offsets = [0, 0], sizes = [16, 8], strides = [1, 1]} : vector<16x48xbf16> to vector<16x8xbf16>
    %19 = vector.extract_strided_slice %14 {offsets = [0, 8], sizes = [16, 8], strides = [1, 1]} : vector<16x48xbf16> to vector<16x8xbf16>
    %20 = tpu.concatenate %18, %19 in 0 : vector<16x8xbf16>, vector<16x8xbf16> -> vector<32x8xbf16>
    %21 = vector.extract_strided_slice %14 {offsets = [0, 32], sizes = [16, 8], strides = [1, 1]} : vector<16x48xbf16> to vector<16x8xbf16>
    %cst_16 = arith.constant dense<0.000000e+00> : vector<32x16xf32>
    %22 = tpu.matmul %20, %21, %cst_16 {dimension_numbers = #tpu.dot_dimension_numbers<[1], [1], [0], [0], [0, 0, 1, 0], [], []>} : vector<32x8xbf16>, vector<16x8xbf16>, vector<32x16xf32> -> vector<32x16xf32>
    %23 = arith.addf %22, %16 : vector<32x16xf32>
    %cst_17 = arith.constant dense<0xFF800000> : vector<32xf32>
    %24 = vector.multi_reduction <maximumf>, %23, %cst_17 [1] : vector<32x16xf32> to vector<32xf32>
    %25 = vector.shape_cast %24 : vector<32xf32> to vector<32x1xf32>
    %26 = vector.broadcast %25 : vector<32x1xf32> to vector<32x16xf32>
    %27 = arith.subf %23, %26 : vector<32x16xf32>
    %28 = math.exp %27 : vector<32x16xf32>
    %cst_18 = arith.constant dense<0.000000e+00> : vector<32xf32>
    %29 = vector.multi_reduction <add>, %28, %cst_18 [1] : vector<32x16xf32> to vector<32xf32>
    %30 = vector.shape_cast %29 : vector<32xf32> to vector<32x1xf32>
    %31 = vector.broadcast %30 : vector<32x1xf32> to vector<32x16xf32>
    %32 = arith.divf %28, %31 : vector<32x16xf32>
    %33 = arith.truncf %32 : vector<32x16xf32> to vector<32x16xbf16>
    %34 = vector.extract_strided_slice %33 {offsets = [0, 0], sizes = [16, 16], strides = [1, 1]} : vector<32x16xbf16> to vector<16x16xbf16>
    %35 = vector.extract_strided_slice %15 {offsets = [0, 0], sizes = [16, 32], strides = [1, 1]} : vector<16x128xbf16> to vector<16x32xbf16>
    %cst_19 = arith.constant dense<0.000000e+00> : vector<16x32xf32>
    %36 = tpu.matmul %34, %35, %cst_19 {dimension_numbers = #tpu.dot_dimension_numbers<[1], [0], [0], [1], [0, 0, 1, 1], [], []>} : vector<16x16xbf16>, vector<16x32xbf16>, vector<16x32xf32> -> vector<16x32xf32>
    %37 = arith.addf %17, %36 : vector<16x32xf32>
    %38 = vector.extract_strided_slice %33 {offsets = [16, 0], sizes = [16, 16], strides = [1, 1]} : vector<32x16xbf16> to vector<16x16xbf16>
    %39 = vector.extract_strided_slice %15 {offsets = [0, 32], sizes = [16, 32], strides = [1, 1]} : vector<16x128xbf16> to vector<16x32xbf16>
    %cst_20 = arith.constant dense<0.000000e+00> : vector<16x32xf32>
    %40 = tpu.matmul %38, %39, %cst_20 {dimension_numbers = #tpu.dot_dimension_numbers<[1], [0], [0], [1], [0, 0, 1, 1], [], []>} : vector<16x16xbf16>, vector<16x32xbf16>, vector<16x32xf32> -> vector<16x32xf32>
    %41 = arith.addf %37, %40 : vector<16x32xf32>
    %42 = vector.extract_strided_slice %14 {offsets = [0, 16], sizes = [16, 8], strides = [1, 1]} : vector<16x48xbf16> to vector<16x8xbf16>
    %43 = vector.extract_strided_slice %14 {offsets = [0, 24], sizes = [16, 8], strides = [1, 1]} : vector<16x48xbf16> to vector<16x8xbf16>
    %44 = tpu.concatenate %42, %43 in 0 : vector<16x8xbf16>, vector<16x8xbf16> -> vector<32x8xbf16>
    %45 = vector.extract_strided_slice %14 {offsets = [0, 40], sizes = [16, 8], strides = [1, 1]} : vector<16x48xbf16> to vector<16x8xbf16>
    %cst_21 = arith.constant dense<0.000000e+00> : vector<32x16xf32>
    %46 = tpu.matmul %44, %45, %cst_21 {dimension_numbers = #tpu.dot_dimension_numbers<[1], [1], [0], [0], [0, 0, 1, 0], [], []>} : vector<32x8xbf16>, vector<16x8xbf16>, vector<32x16xf32> -> vector<32x16xf32>
    %47 = arith.addf %46, %16 : vector<32x16xf32>
    %cst_22 = arith.constant dense<0xFF800000> : vector<32xf32>
    %48 = vector.multi_reduction <maximumf>, %47, %cst_22 [1] : vector<32x16xf32> to vector<32xf32>
    %49 = vector.shape_cast %48 : vector<32xf32> to vector<32x1xf32>
    %50 = vector.broadcast %49 : vector<32x1xf32> to vector<32x16xf32>
    %51 = arith.subf %47, %50 : vector<32x16xf32>
    %52 = math.exp %51 : vector<32x16xf32>
    %cst_23 = arith.constant dense<0.000000e+00> : vector<32xf32>
    %53 = vector.multi_reduction <add>, %52, %cst_23 [1] : vector<32x16xf32> to vector<32xf32>
    %54 = vector.shape_cast %53 : vector<32xf32> to vector<32x1xf32>
    %55 = vector.broadcast %54 : vector<32x1xf32> to vector<32x16xf32>
    %56 = arith.divf %52, %55 : vector<32x16xf32>
    %57 = arith.truncf %56 : vector<32x16xf32> to vector<32x16xbf16>
    %58 = vector.extract_strided_slice %57 {offsets = [0, 0], sizes = [16, 16], strides = [1, 1]} : vector<32x16xbf16> to vector<16x16xbf16>
    %59 = vector.extract_strided_slice %15 {offsets = [0, 64], sizes = [16, 32], strides = [1, 1]} : vector<16x128xbf16> to vector<16x32xbf16>
    %cst_24 = arith.constant dense<0.000000e+00> : vector<16x32xf32>
    %60 = tpu.matmul %58, %59, %cst_24 {dimension_numbers = #tpu.dot_dimension_numbers<[1], [0], [0], [1], [0, 0, 1, 1], [], []>} : vector<16x16xbf16>, vector<16x32xbf16>, vector<16x32xf32> -> vector<16x32xf32>
    %61 = arith.addf %41, %60 : vector<16x32xf32>
    %62 = vector.extract_strided_slice %57 {offsets = [16, 0], sizes = [16, 16], strides = [1, 1]} : vector<32x16xbf16> to vector<16x16xbf16>
    %63 = vector.extract_strided_slice %15 {offsets = [0, 96], sizes = [16, 32], strides = [1, 1]} : vector<16x128xbf16> to vector<16x32xbf16>
    %cst_25 = arith.constant dense<0.000000e+00> : vector<16x32xf32>
    %64 = tpu.matmul %62, %63, %cst_25 {dimension_numbers = #tpu.dot_dimension_numbers<[1], [0], [0], [1], [0, 0, 1, 1], [], []>} : vector<16x16xbf16>, vector<16x32xbf16>, vector<16x32xf32> -> vector<16x32xf32>
    %65 = arith.addf %61, %64 : vector<16x32xf32>
    %c0_26 = arith.constant 0 : index
    %c0_27 = arith.constant 0 : index
    %66 = vector.load %arg8[%c0_26, %c0_27] : memref<16x32xf32, #tpu.memory_space<vmem>>, vector<16x32xf32>
    tpu.vector_store %arg8[%c0_26, %c0_27], %65 {strides = array<i32>} : memref<16x32xf32, #tpu.memory_space<vmem>>, vector<16x32xf32>,
    return
  }
  func.func @transform_0(%arg0: i32) -> (i32, i32) {
    %c0_i32 = arith.constant 0 : i32
    %c0_i32_0 = arith.constant 0 : i32
    %c0_i32_1 = arith.constant 0 : i32
    return %c0_i32, %c0_i32_0 : i32, i32
  }
  func.func @transform_1(%arg0: i32) -> (i32, i32) {
    %c0_i32 = arith.constant 0 : i32
    %c0_i32_0 = arith.constant 0 : i32
    %c0_i32_1 = arith.constant 0 : i32
    return %c0_i32, %c0_i32_0 : i32, i32
  }
  func.func @transform_2(%arg0: i32) -> (i32, i32) {
    %c0_i32 = arith.constant 0 : i32
    %c0_i32_0 = arith.constant 0 : i32
    %c0_i32_1 = arith.constant 0 : i32
    return %c0_i32, %c0_i32_0 : i32, i32
  }
  func.func @transform_3(%arg0: i32) -> (i32, i32) {
    %c0_i32 = arith.constant 0 : i32
    %c0_i32_0 = arith.constant 0 : i32
    %c0_i32_1 = arith.constant 0 : i32
    return %c0_i32, %c0_i32_0 : i32, i32
  }
  func.func @transform_4(%arg0: i32) -> (i32, i32) {
    %c0_i32 = arith.constant 0 : i32
    %c0_i32_0 = arith.constant 0 : i32
    %c0_i32_1 = arith.constant 0 : i32
    return %c0_i32, %c0_i32_0 : i32, i32
  }
  func.func @transform_5(%arg0: i32) -> (i32, i32) {
    %c0_i32 = arith.constant 0 : i32
    %c0_i32_0 = arith.constant 0 : i32
    %c0_i32_1 = arith.constant 0 : i32
    return %c0_i32, %c0_i32_0 : i32, i32
  }
  func.func @transform_6(%arg0: i32) -> (i32, i32) {
    %c0_i32 = arith.constant 0 : i32
    %c0_i32_0 = arith.constant 0 : i32
    %c0_i32_1 = arith.constant 0 : i32
    return %c0_i32, %c0_i32_0 : i32, i32
  }
  func.func @transform_7(%arg0: i32) -> (i32, i32) {
    %c0_i32 = arith.constant 0 : i32
    %c0_i32_0 = arith.constant 0 : i32
    %c0_i32_1 = arith.constant 0 : i32
    return %c0_i32, %c0_i32_0 : i32, i32
  }
}

</mosaic_0001>

<llo_original>
// kernel: tpu_custom_call.1
$region0: #{tpu_custom_call.1}
  #allocation0 [shape = 'u32[]', space=smem, size = 0x4, offset = 0x4, fixed_abs, tag = 'smem constant byte address 0x4 - core index']
  #allocation1 [shape = 'u32[144,128]{1,0:T(1,128)}', space=vmem, size = 0x12000, scoped, tag = 'internal scratch']
  %s0 = inlined_call_operand.vmem [shape: f32[16,32], index: 0, kind: input, shape index: {}]
  %s1 = inlined_call_operand.hbm [shape: bf16[32,48], index: 1, kind: input, shape index: {}]
  %s2 = inlined_call_operand.hbm [shape: bf16[32,128], index: 2, kind: input, shape index: {}]
  %s3 = inlined_call_operand.vmem [shape: bf16[48,48], index: 3, kind: input, shape index: {}]
  %s4 = inlined_call_operand.hbm [shape: f32[16,48], index: 4, kind: input, shape index: {}]
  %s5 = inlined_call_operand.hbm [shape: f32[16,48], index: 5, kind: input, shape index: {}]
  %s6 = inlined_call_operand.vmem [shape: f32[32,16], index: 6, kind: input, shape index: {}]
  %s7 = inlined_call_operand.hbm [shape: f32[16,32], index: 7, kind: output, shape index: {}]
  %s8 = sld [smem:[#allocation0]]
  $region54: #{tpu_custom_call.1} parent=0
    _
  %s10 = ssub.s32 1, %s8
  %s11 = scalar_select 0, %s10, %s8
  $region1: #{tpu_custom_call.1} parent=0
    #allocation2 [shape = 'u8[8192]{0}', space=vmem, size = 0x2000, scoped, tag = 'input window, operand 1, single buffered']
    #allocation3 [shape = 's32[1]{0}', space=sflag, size = 0x4, scoped, tag = 'scoped memory for tpu_custom_call.1']
    #allocation4 [shape = 's32[1]{0}', space=sflag, size = 0x4, scoped, tag = 'scoped memory for tpu_custom_call.1']
    #allocation5 [shape = 'u8[8192]{0}', space=vmem, size = 0x2000, scoped, tag = 'input window, operand 2, single buffered']
    #allocation6 [shape = 's32[1]{0}', space=sflag, size = 0x4, scoped, tag = 'scoped memory for tpu_custom_call.1']
    #allocation7 [shape = 'u8[8192]{0}', space=vmem, size = 0x2000, scoped, tag = 'input window, operand 4, single buffered']
    #allocation8 [shape = 'u8[8192]{0}', space=vmem, size = 0x2000, scoped, tag = 'input window, operand 5, single buffered']
    #allocation9 [shape = 's32[1]{0}', space=sflag, size = 0x4, scoped, tag = 'scoped memory for tpu_custom_call.1']
    #allocation10 [shape = 'u8[8192]{0}', space=vmem, size = 0x2000, scoped, tag = 'output window, operand 0, single buffered']
    %12 = vsyncpa [#allocation3], 0
    %13 = vsyncpa [#allocation6], 0
    %14 = vsyncpa [#allocation9], 0
    %15 = vsyncpa [#allocation4], 0
    // Predicated region
    $region2: #{tpu_custom_call.1} parent=1 // pred_check
      _
    $region3: #{tpu_custom_call.1} parent=1 // pred_check_branch
      %17 = sbr.rel (0) target = $region5
    $region4: #{tpu_custom_call.1} parent=1 // pred_region
      _
    $region5: #{tpu_custom_call.1} parent=1 // pred_fallthru
      _
    // Predicated region
    $region6: #{tpu_custom_call.1} parent=1 // pred_check
      _
    $region7: #{tpu_custom_call.1} parent=1 // pred_check_branch
      %19 = sbr.rel (0) target = $region9
    $region8: #{tpu_custom_call.1} parent=1 // pred_region
      %s21 = ssub.s32 256, 256
      %22 = vsyncadd [#allocation3], %s21
      %s23 = sshll.u32 [#allocation2], 4
      %s24 = int_to_ptr.vmem [resolvable:$true] %s23
      %29 = dma.hbm_to_vmem [thread:$0]  %s1, 256, %s24, [#allocation3], 64, 64, 4
    $region9: #{tpu_custom_call.1} parent=1 // pred_fallthru
      _
    // Predicated region
    $region10: #{tpu_custom_call.1} parent=1 // pred_check
      _
    $region11: #{tpu_custom_call.1} parent=1 // pred_check_branch
      %31 = sbr.rel (0) target = $region13
    $region12: #{tpu_custom_call.1} parent=1 // pred_region
      %s33 = ssub.s32 256, 256
      %34 = vsyncadd [#allocation6], %s33
      %s35 = sshll.u32 [#allocation5], 4
      %s36 = int_to_ptr.vmem [resolvable:$true] %s35
      %41 = dma.hbm_to_vmem [thread:$0]  %s2, 256, %s36, [#allocation6], 64, 64, 4
    $region13: #{tpu_custom_call.1} parent=1 // pred_fallthru
      _
    // Predicated region
    $region14: #{tpu_custom_call.1} parent=1 // pred_check
      _
    $region15: #{tpu_custom_call.1} parent=1 // pred_check_branch
      %43 = sbr.rel (0) target = $region17
    $region16: #{tpu_custom_call.1} parent=1 // pred_region
      _
    $region17: #{tpu_custom_call.1} parent=1 // pred_fallthru
      _
    // Predicated region
    $region18: #{tpu_custom_call.1} parent=1 // pred_check
      _
    $region19: #{tpu_custom_call.1} parent=1 // pred_check_branch
      %45 = sbr.rel (0) target = $region21
    $region20: #{tpu_custom_call.1} parent=1 // pred_region
      %s47 = ssub.s32 256, 256
      %48 = vsyncadd [#allocation6], %s47
      %s49 = sshll.u32 [#allocation7], 4
      %s50 = int_to_ptr.vmem [resolvable:$true] %s49
      %55 = dma.hbm_to_vmem [thread:$0]  %s4, 256, %s50, [#allocation6], 128, 128, 8
    $region21: #{tpu_custom_call.1} parent=1 // pred_fallthru
      _
    // Predicated region
    $region22: #{tpu_custom_call.1} parent=1 // pred_check
      _
    $region23: #{tpu_custom_call.1} parent=1 // pred_check_branch
      %57 = sbr.rel (0) target = $region25
    $region24: #{tpu_custom_call.1} parent=1 // pred_region
      %s59 = ssub.s32 256, 256
      %60 = vsyncadd [#allocation9], %s59
      %s61 = sshll.u32 [#allocation8], 4
      %s62 = int_to_ptr.vmem [resolvable:$true] %s61
      %67 = dma.hbm_to_vmem [thread:$0]  %s5, 256, %s62, [#allocation9], 128, 128, 8
    $region25: #{tpu_custom_call.1} parent=1 // pred_fallthru
      _
    // Predicated region
    $region26: #{tpu_custom_call.1} parent=1 // pred_check
      _
    $region27: #{tpu_custom_call.1} parent=1 // pred_check_branch
      %69 = sbr.rel (0) target = $region29
    $region28: #{tpu_custom_call.1} parent=1 // pred_region
      _
    $region29: #{tpu_custom_call.1} parent=1 // pred_fallthru
      _
    // Predicated region
    $region30: #{tpu_custom_call.1} parent=1 // pred_check
      _
    $region31: #{tpu_custom_call.1} parent=1 // pred_check_branch
      %71 = sbr.rel (0) target = $region33
    $region32: #{tpu_custom_call.1} parent=1 // pred_region
      %72 = dma.done [#allocation3], 256
    $region33: #{tpu_custom_call.1} parent=1 // pred_fallthru
      _
    // Predicated region
    $region34: #{tpu_custom_call.1} parent=1 // pred_check
      _
    $region35: #{tpu_custom_call.1} parent=1 // pred_check_branch
      %74 = sbr.rel (0) target = $region37
    $region36: #{tpu_custom_call.1} parent=1 // pred_region
      %75 = dma.done [#allocation6], 256
    $region37: #{tpu_custom_call.1} parent=1 // pred_fallthru
      _
    // Predicated region
    $region38: #{tpu_custom_call.1} parent=1 // pred_check
      _
    $region39: #{tpu_custom_call.1} parent=1 // pred_check_branch
      %77 = sbr.rel (0) target = $region41
    $region40: #{tpu_custom_call.1} parent=1 // pred_region
      %78 = dma.done [#allocation6], 256
    $region41: #{tpu_custom_call.1} parent=1 // pred_fallthru
      _
    // Predicated region
    $region42: #{tpu_custom_call.1} parent=1 // pred_check
      _
    $region43: #{tpu_custom_call.1} parent=1 // pred_check_branch
      %80 = sbr.rel (0) target = $region45
    $region44: #{tpu_custom_call.1} parent=1 // pred_region
      %81 = dma.done [#allocation9], 256
    $region45: #{tpu_custom_call.1} parent=1 // pred_fallthru
      _
    %v83 = vld [vmem:[%s0] sm:$0xff]
    %v84 = vld [vmem:[%s0 + $0x8] sm:$0xff]
    %v85 = vpack.c.bf16 %v84, %v83
    %v86 = vld [vmem:[#allocation2] sm:$0xf]
    %v87 = vld [vmem:[#allocation2 + $0x4] sm:$0xf]
    %v88 = vld [vmem:[#allocation2 + $0x8] sm:$0xf]
    %v89 = vld [vmem:[#allocation2 + $0xc] sm:$0xf]
    %v94 = vunpack.c.l.b16 %v86
    %v95 = vunpack.c.l.b16 %v87
    %v96 = vunpack.c.l.b16 %v88
    %v97 = vunpack.c.l.b16 %v89
    %v98 = vpack.c.b16 %v95, %v94
    %v99 = vpack.c.b16 %v97, %v96
    %vm102 = vcmask 261120
    %v104 = vsel %vm102, %v85, 0
    %106 = vmatprep.subr.bf16.mxu0 0
    %107 = vmatpush1.bf16.msra.mxu0 %v98
    %108 = vmatprep.subr.bf16.mxu0 0
    %109 = vmatpush1.bf16.msra.mxu0 %v99
    %110 = vmatprep.subr.bf16.mxu0 0
    %111 = vmatpush1.bf16.msra.mxu0 0
    %112 = vmatprep.subr.bf16.mxu0 0
    %113 = vmatpush1.bf16.msra.mxu0 0
    %114 = vmatprep.subr.bf16.mxu0 0
    %115 = vmatpush1.bf16.msra.mxu0 0
    %116 = vmatprep.subr.bf16.mxu0 0
    %117 = vmatpush1.bf16.msra.mxu0 0
    %118 = vmatprep.subr.bf16.mxu0 0
    %119 = vmatpush1.bf16.msra.mxu0 0
    %120 = vmatprep.subr.bf16.mxu0 0
    %121 = vmatpush1.bf16.msra.mxu0 0
    %122 = vmatprep.subr.bf16.mxu0 0
    %123 = vmatpush1.bf16.msra.mxu0 0
    %124 = vmatprep.subr.bf16.mxu0 0
    %125 = vmatpush1.bf16.msra.mxu0 0
    %126 = vmatprep.subr.bf16.mxu0 0
    %127 = vmatpush1.bf16.msra.mxu0 0
    %128 = vmatprep.subr.bf16.mxu0 0
    %129 = vmatpush1.bf16.msra.mxu0 0
    %130 = vmatprep.subr.bf16.mxu0 0
    %131 = vmatpush1.bf16.msra.mxu0 0
    %132 = vmatprep.subr.bf16.mxu0 0
    %133 = vmatpush1.bf16.msra.mxu0 0
    %134 = vmatprep.subr.bf16.mxu0 0
    %135 = vmatpush1.bf16.msra.mxu0 0
    %136 = vmatprep.subr.bf16.mxu0 0
    %137 = vmatpush1.bf16.msra.mxu0 0
    %138 = vmatprep.mubr.bf16.mxu0 0
    %139 = vmatmul.mubr.bf16.gmra.mrb[0].mxu0 %v104
    %v140 = vpop.f32.mrb[0].mxu0
    %v141 = vadd.f32 0.0, %v140
    %v142 = vpop.f32.mrb[0].mxu0
    %v143 = vpop.f32.mrb[0].mxu0
    %v144 = vadd.f32 0.0, %v143
    %v145 = vpop.f32.mrb[0].mxu0
    %146 = vdwg.mxu0
    %v147 = vld [vmem:[#allocation5] sm:$0xf]
    %v148 = vld [vmem:[#allocation5 + $0x4] sm:$0xf]
    %v149 = vld [vmem:[#allocation5 + $0x8] sm:$0xf]
    %v150 = vld [vmem:[#allocation5 + $0xc] sm:$0xf]
    %v155 = vunpack.c.l.b16 %v147
    %v156 = vunpack.c.l.b16 %v148
    %v157 = vunpack.c.l.b16 %v149
    %v158 = vunpack.c.l.b16 %v150
    %v159 = vpack.c.b16 %v156, %v155
    %v160 = vpack.c.b16 %v158, %v157
    %163 = vmatprep.subr.bf16.mxu0 0
    %164 = vmatpush1.bf16.msra.mxu0 %v159
    %165 = vmatprep.subr.bf16.mxu0 0
    %166 = vmatpush1.bf16.msra.mxu0 %v160
    %167 = vmatprep.subr.bf16.mxu0 0
    %168 = vmatpush1.bf16.msra.mxu0 0
    %169 = vmatprep.subr.bf16.mxu0 0
    %170 = vmatpush1.bf16.msra.mxu0 0
    %171 = vmatprep.subr.bf16.mxu0 0
    %172 = vmatpush1.bf16.msra.mxu0 0
    %173 = vmatprep.subr.bf16.mxu0 0
    %174 = vmatpush1.bf16.msra.mxu0 0
    %175 = vmatprep.subr.bf16.mxu0 0
    %176 = vmatpush1.bf16.msra.mxu0 0
    %177 = vmatprep.subr.bf16.mxu0 0
    %178 = vmatpush1.bf16.msra.mxu0 0
    %179 = vmatprep.subr.bf16.mxu0 0
    %180 = vmatpush1.bf16.msra.mxu0 0
    %181 = vmatprep.subr.bf16.mxu0 0
    %182 = vmatpush1.bf16.msra.mxu0 0
    %183 = vmatprep.subr.bf16.mxu0 0
    %184 = vmatpush1.bf16.msra.mxu0 0
    %185 = vmatprep.subr.bf16.mxu0 0
    %186 = vmatpush1.bf16.msra.mxu0 0
    %187 = vmatprep.subr.bf16.mxu0 0
    %188 = vmatpush1.bf16.msra.mxu0 0
    %189 = vmatprep.subr.bf16.mxu0 0
    %190 = vmatpush1.bf16.msra.mxu0 0
    %191 = vmatprep.subr.bf16.mxu0 0
    %192 = vmatpush1.bf16.msra.mxu0 0
    %193 = vmatprep.subr.bf16.mxu0 0
    %194 = vmatpush1.bf16.msra.mxu0 0
    %195 = vmatprep.mubr.bf16.mxu0 0
    %196 = vmatmul.mubr.bf16.gmra.mrb[0].mxu0 %v104
    %v197 = vpop.f32.mrb[0].mxu0
    %v198 = vadd.f32 0.0, %v197
    %v199 = vpop.f32.mrb[0].mxu0
    %v200 = vpop.f32.mrb[0].mxu0
    %v201 = vadd.f32 0.0, %v200
    %v202 = vpop.f32.mrb[0].mxu0
    %203 = vdwg.mxu0
    %v204 = vpack.c.bf16 %v144, %v141
    %v205 = vld [vmem:[%s3] sm:$0xf]
    %v206 = vld [vmem:[%s3 + $0x4] sm:$0xf]
    %v207 = vld [vmem:[%s3 + $0x8] sm:$0xf]
    %v208 = vld [vmem:[%s3 + $0xc] sm:$0xf]
    %v209 = vld [vmem:[%s3 + $0x10] sm:$0xf]
    %v210 = vld [vmem:[%s3 + $0x14] sm:$0xf]
    %v217 = vunpack.c.l.b16 %v205
    %v218 = vunpack.c.l.b16 %v206
    %v219 = vunpack.c.l.b16 %v207
    %v220 = vunpack.c.l.b16 %v208
    %v221 = vunpack.c.l.b16 %v209
    %v222 = vunpack.c.l.b16 %v210
    %v223 = vpack.c.b16 %v218, %v217
    %v224 = vpack.c.b16 %v220, %v219
    %v225 = vpack.c.b16 %v222, %v221
    %vm229 = vcmask 392192
    %v231 = vsel %vm229, %v204, 0
    %233 = vmatprep.subr.bf16.mxu0 0
    %234 = vmatpush1.bf16.msra.mxu0 %v223
    %235 = vmatprep.subr.bf16.mxu0 0
    %236 = vmatpush1.bf16.msra.mxu0 %v224
    %237 = vmatprep.subr.bf16.mxu0 0
    %238 = vmatpush1.bf16.msra.mxu0 %v225
    %239 = vmatprep.subr.bf16.mxu0 0
    %240 = vmatpush1.bf16.msra.mxu0 0
    %241 = vmatprep.subr.bf16.mxu0 0
    %242 = vmatpush1.bf16.msra.mxu0 0
    %243 = vmatprep.subr.bf16.mxu0 0
    %244 = vmatpush1.bf16.msra.mxu0 0
    %245 = vmatprep.subr.bf16.mxu0 0
    %246 = vmatpush1.bf16.msra.mxu0 0
    %247 = vmatprep.subr.bf16.mxu0 0
    %248 = vmatpush1.bf16.msra.mxu0 0
    %249 = vmatprep.subr.bf16.mxu0 0
    %250 = vmatpush1.bf16.msra.mxu0 0
    %251 = vmatprep.subr.bf16.mxu0 0
    %252 = vmatpush1.bf16.msra.mxu0 0
    %253 = vmatprep.subr.bf16.mxu0 0
    %254 = vmatpush1.bf16.msra.mxu0 0
    %255 = vmatprep.subr.bf16.mxu0 0
    %256 = vmatpush1.bf16.msra.mxu0 0
    %257 = vmatprep.subr.bf16.mxu0 0
    %258 = vmatpush1.bf16.msra.mxu0 0
    %259 = vmatprep.subr.bf16.mxu0 0
    %260 = vmatpush1.bf16.msra.mxu0 0
    %261 = vmatprep.subr.bf16.mxu0 0
    %262 = vmatpush1.bf16.msra.mxu0 0
    %263 = vmatprep.subr.bf16.mxu0 0
    %264 = vmatpush1.bf16.msra.mxu0 0
    %265 = vmatprep.mubr.bf16.mxu0 0
    %266 = vmatmul.mubr.bf16.gmra.mrb[0].mxu0 %v231
    %v267 = vpop.f32.mrb[0].mxu0
    %v268 = vadd.f32 0.0, %v267
    %v269 = vpop.f32.mrb[0].mxu0
    %v270 = vpop.f32.mrb[0].mxu0
    %v271 = vadd.f32 0.0, %v270
    %v272 = vpop.f32.mrb[0].mxu0
    %273 = vdwg.mxu0
    %v274 = vld [vmem:[#allocation7] sm:$0xff]
    %v275 = vld [vmem:[#allocation7 + $0x8] sm:$0xff]
    %v276 = vmul.f32 %v141, %v274
    %v277 = vmul.f32 %v144, %v275
    %v278 = vld [vmem:[#allocation8] sm:$0xff]
    %v279 = vld [vmem:[#allocation8 + $0x8] sm:$0xff]
    %v280 = vmul.f32 %v268, %v278
    %v281 = vmul.f32 %v271, %v279
    %v282 = vadd.f32 %v276, %v280
    %v283 = vadd.f32 %v277, %v281
    %v284 = vpack.c.bf16 %v283, %v282
    %v285 = vpack.c.bf16 %v201, %v198
    %v286 = vld [vmem:[%s6] sm:$0xff]
    %v287 = vld [vmem:[%s6 + $0x8] sm:$0xff]
    %v288 = vld [vmem:[%s6 + $0x10] sm:$0xff]
    %v289 = vld [vmem:[%s6 + $0x18] sm:$0xff]
    %291 = vrot.lane.b32.xlu0 %v284, 120
    %v292 = vpop.permute.xlu0 %291
    %293 = vrot.lane.b32.xlu0 %v284, 96
    %v294 = vpop.permute.xlu0 %293
    %vm295 = vcmask 64512
    %v297 = vsel %vm295, %v284, 0
    %v300 = vsel %vm295, %v292, 0
    %v303 = vsel %vm295, %v294, 0
    %305 = vmatprep.subr.bf16.mxu0 0
    %306 = vmatpush1.bf16.xpose.msra.mxu0 %v303
    %307 = vmatprep.subr.bf16.mxu0 0
    %308 = vmatpush1.bf16.xpose.msra.mxu0 0
    %309 = vmatprep.subr.bf16.mxu0 0
    %310 = vmatpush1.bf16.xpose.msra.mxu0 0
    %311 = vmatprep.subr.bf16.mxu0 0
    %312 = vmatpush1.bf16.xpose.msra.mxu0 0
    %313 = vmatprep.subr.bf16.mxu0 0
    %314 = vmatpush1.bf16.xpose.msra.mxu0 0
    %315 = vmatprep.subr.bf16.mxu0 0
    %316 = vmatpush1.bf16.xpose.msra.mxu0 0
    %317 = vmatprep.subr.bf16.mxu0 0
    %318 = vmatpush1.bf16.xpose.msra.mxu0 0
    %319 = vmatprep.subr.bf16.mxu0 0
    %320 = vmatpush1.bf16.xpose.msra.mxu0 0
    %321 = vmatprep.subr.bf16.mxu0 0
    %322 = vmatpush1.bf16.xpose.msra.mxu0 0
    %323 = vmatprep.subr.bf16.mxu0 0
    %324 = vmatpush1.bf16.xpose.msra.mxu0 0
    %325 = vmatprep.subr.bf16.mxu0 0
    %326 = vmatpush1.bf16.xpose.msra.mxu0 0
    %327 = vmatprep.subr.bf16.mxu0 0
    %328 = vmatpush1.bf16.xpose.msra.mxu0 0
    %329 = vmatprep.subr.bf16.mxu0 0
    %330 = vmatpush1.bf16.xpose.msra.mxu0 0
    %331 = vmatprep.subr.bf16.mxu0 0
    %332 = vmatpush1.bf16.xpose.msra.mxu0 0
    %333 = vmatprep.subr.bf16.mxu0 0
    %334 = vmatpush1.bf16.xpose.msra.mxu0 0
    %335 = vmatprep.subr.bf16.mxu0 0
    %336 = vmatpush1.bf16.xpose.msra.mxu0 0
    %337 = vmatprep.mubr.bf16.mxu0 0
    %338 = vmatmul.mubr.bf16.gmra.mrb[0].mxu0 %v297
    %v339 = vpop.f32.mrb[0].mxu0
    %v340 = vadd.f32 %v286, %v339
    %v341 = vpop.f32.mrb[0].mxu0
    %v342 = vpop.f32.mrb[0].mxu0
    %v343 = vadd.f32 %v287, %v342
    %v344 = vpop.f32.mrb[0].mxu0
    %345 = vmatprep.mubr.bf16.mxu0 0
    %346 = vmatmul.mubr.bf16.gmra.mrb[0].mxu0 %v300
    %v347 = vpop.f32.mrb[0].mxu0
    %v348 = vadd.f32 %v288, %v347
    %v349 = vpop.f32.mrb[0].mxu0
    %v350 = vpop.f32.mrb[0].mxu0
    %v351 = vadd.f32 %v289, %v350
    %v352 = vpop.f32.mrb[0].mxu0
    %353 = vdwg.mxu0
    %vm354 = vcmask 130048
    %v355 = vsel %vm354, %v340, -inf
    %356 = vmax.xlane.f32.xlu0 %v355
    %v357 = vpop.xlane.xlu0 %356
    %v358 = vsel %vm354, %v343, -inf
    %359 = vmax.xlane.f32.xlu0 %v358
    %v360 = vpop.xlane.xlu0 %359
    %v361 = vsel %vm354, %v348, -inf
    %362 = vmax.xlane.f32.xlu0 %v361
    %v363 = vpop.xlane.xlu0 %362
    %v364 = vsel %vm354, %v351, -inf
    %365 = vmax.xlane.f32.xlu0 %v364
    %v366 = vpop.xlane.xlu0 %365
    %v367 = vsub.f32 %v340, %v357
    %v368 = vsub.f32 %v343, %v360
    %v369 = vsub.f32 %v348, %v363
    %v370 = vsub.f32 %v351, %v366
    %v371 = vmul.f32 %v367, 1.442695
    %v372 = vpow.pop %v371
    %v373 = vmul.f32 %v368, 1.442695
    %v374 = vpow.pop %v373
    %v375 = vmul.f32 %v369, 1.442695
    %v376 = vpow.pop %v375
    %v377 = vmul.f32 %v370, 1.442695
    %v378 = vpow.pop %v377
    %v379 = vsel %vm354, %v372, 0.0
    %380 = vadd.xlane.f32.xlu0 %v379
    %v381 = vpop.xlane.xlu0 %380
    %v382 = vsel %vm354, %v374, 0.0
    %383 = vadd.xlane.f32.xlu0 %v382
    %v384 = vpop.xlane.xlu0 %383
    %v385 = vsel %vm354, %v376, 0.0
    %386 = vadd.xlane.f32.xlu0 %v385
    %v387 = vpop.xlane.xlu0 %386
    %v388 = vsel %vm354, %v378, 0.0
    %389 = vadd.xlane.f32.xlu0 %v388
    %v390 = vpop.xlane.xlu0 %389
    %v391 = vrcp.pop %v381
    %v392 = vmul.f32 %v372, %v391
    %v393 = vrcp.pop %v384
    %v394 = vmul.f32 %v374, %v393
    %v395 = vrcp.pop %v387
    %v396 = vmul.f32 %v376, %v395
    %v397 = vrcp.pop %v390
    %v398 = vmul.f32 %v378, %v397
    %v399 = vpack.c.bf16 %v394, %v392
    %v400 = vpack.c.bf16 %v398, %v396
    %402 = vrot.lane.b32.xlu0 %v285, 96
    %v403 = vpop.permute.xlu0 %402
    %v406 = vsel %vm354, %v400, 0
    %408 = vmatprep.subr.bf16.mxu0 0
    %409 = vmatpush1.bf16.msra.mxu0 %v403
    %410 = vmatprep.subr.bf16.mxu0 0
    %411 = vmatpush1.bf16.msra.mxu0 0
    %412 = vmatprep.subr.bf16.mxu0 0
    %413 = vmatpush1.bf16.msra.mxu0 0
    %414 = vmatprep.subr.bf16.mxu0 0
    %415 = vmatpush1.bf16.msra.mxu0 0
    %416 = vmatprep.subr.bf16.mxu0 0
    %417 = vmatpush1.bf16.msra.mxu0 0
    %418 = vmatprep.subr.bf16.mxu0 0
    %419 = vmatpush1.bf16.msra.mxu0 0
    %420 = vmatprep.subr.bf16.mxu0 0
    %421 = vmatpush1.bf16.msra.mxu0 0
    %422 = vmatprep.subr.bf16.mxu0 0
    %423 = vmatpush1.bf16.msra.mxu0 0
    %424 = vmatprep.subr.bf16.mxu0 0
    %425 = vmatpush1.bf16.msra.mxu0 0
    %426 = vmatprep.subr.bf16.mxu0 0
    %427 = vmatpush1.bf16.msra.mxu0 0
    %428 = vmatprep.subr.bf16.mxu0 0
    %429 = vmatpush1.bf16.msra.mxu0 0
    %430 = vmatprep.subr.bf16.mxu0 0
    %431 = vmatpush1.bf16.msra.mxu0 0
    %432 = vmatprep.subr.bf16.mxu0 0
    %433 = vmatpush1.bf16.msra.mxu0 0
    %434 = vmatprep.subr.bf16.mxu0 0
    %435 = vmatpush1.bf16.msra.mxu0 0
    %436 = vmatprep.subr.bf16.mxu0 0
    %437 = vmatpush1.bf16.msra.mxu0 0
    %438 = vmatprep.subr.bf16.mxu0 0
    %439 = vmatpush1.bf16.msra.mxu0 0
    %440 = vmatprep.mubr.bf16.mxu0 0
    %441 = vmatmul.mubr.bf16.gmra.mrb[0].mxu0 %v406
    %v442 = vpop.f32.mrb[0].mxu0
    %v443 = vadd.f32 0.0, %v442
    %v444 = vpop.f32.mrb[0].mxu0
    %v445 = vpop.f32.mrb[0].mxu0
    %v446 = vadd.f32 0.0, %v445
    %v447 = vpop.f32.mrb[0].mxu0
    %448 = vdwg.mxu0
    %v450 = vsel %vm354, %v399, 0
    %452 = vmatprep.subr.bf16.mxu0 0
    %453 = vmatpush1.bf16.msra.mxu0 %v285
    %454 = vmatprep.subr.bf16.mxu0 0
    %455 = vmatpush1.bf16.msra.mxu0 0
    %456 = vmatprep.subr.bf16.mxu0 0
    %457 = vmatpush1.bf16.msra.mxu0 0
    %458 = vmatprep.subr.bf16.mxu0 0
    %459 = vmatpush1.bf16.msra.mxu0 0
    %460 = vmatprep.subr.bf16.mxu0 0
    %461 = vmatpush1.bf16.msra.mxu0 0
    %462 = vmatprep.subr.bf16.mxu0 0
    %463 = vmatpush1.bf16.msra.mxu0 0
    %464 = vmatprep.subr.bf16.mxu0 0
    %465 = vmatpush1.bf16.msra.mxu0 0
    %466 = vmatprep.subr.bf16.mxu0 0
    %467 = vmatpush1.bf16.msra.mxu0 0
    %468 = vmatprep.subr.bf16.mxu0 0
    %469 = vmatpush1.bf16.msra.mxu0 0
    %470 = vmatprep.subr.bf16.mxu0 0
    %471 = vmatpush1.bf16.msra.mxu0 0
    %472 = vmatprep.subr.bf16.mxu0 0
    %473 = vmatpush1.bf16.msra.mxu0 0
    %474 = vmatprep.subr.bf16.mxu0 0
    %475 = vmatpush1.bf16.msra.mxu0 0
    %476 = vmatprep.subr.bf16.mxu0 0
    %477 = vmatpush1.bf16.msra.mxu0 0
    %478 = vmatprep.subr.bf16.mxu0 0
    %479 = vmatpush1.bf16.msra.mxu0 0
    %480 = vmatprep.subr.bf16.mxu0 0
    %481 = vmatpush1.bf16.msra.mxu0 0
    %482 = vmatprep.subr.bf16.mxu0 0
    %483 = vmatpush1.bf16.msra.mxu0 0
    %484 = vmatprep.mubr.bf16.mxu0 0
    %485 = vmatmul.mubr.bf16.gmra.mrb[0].mxu0 %v450
    %v486 = vpop.f32.mrb[0].mxu0
    %v487 = vadd.f32 %v443, %v486
    %v488 = vpop.f32.mrb[0].mxu0
    %v489 = vpop.f32.mrb[0].mxu0
    %v490 = vadd.f32 %v446, %v489
    %v491 = vpop.f32.mrb[0].mxu0
    %492 = vdwg.mxu0
    %493 = vrot.lane.b32.xlu0 %v284, 112
    %v494 = vpop.permute.xlu0 %493
    %495 = vrot.lane.b32.xlu0 %v292, 112
    %v496 = vpop.permute.xlu0 %495
    %497 = vrot.lane.b32.xlu0 %v284, 88
    %v498 = vpop.permute.xlu0 %497
    %v500 = vsel %vm295, %v494, 0
    %v503 = vsel %vm295, %v496, 0
    %v506 = vsel %vm295, %v498, 0
    %508 = vmatprep.subr.bf16.mxu0 0
    %509 = vmatpush1.bf16.xpose.msra.mxu0 %v506
    %510 = vmatprep.subr.bf16.mxu0 0
    %511 = vmatpush1.bf16.xpose.msra.mxu0 0
    %512 = vmatprep.subr.bf16.mxu0 0
    %513 = vmatpush1.bf16.xpose.msra.mxu0 0
    %514 = vmatprep.subr.bf16.mxu0 0
    %515 = vmatpush1.bf16.xpose.msra.mxu0 0
    %516 = vmatprep.subr.bf16.mxu0 0
    %517 = vmatpush1.bf16.xpose.msra.mxu0 0
    %518 = vmatprep.subr.bf16.mxu0 0
    %519 = vmatpush1.bf16.xpose.msra.mxu0 0
    %520 = vmatprep.subr.bf16.mxu0 0
    %521 = vmatpush1.bf16.xpose.msra.mxu0 0
    %522 = vmatprep.subr.bf16.mxu0 0
    %523 = vmatpush1.bf16.xpose.msra.mxu0 0
    %524 = vmatprep.subr.bf16.mxu0 0
    %525 = vmatpush1.bf16.xpose.msra.mxu0 0
    %526 = vmatprep.subr.bf16.mxu0 0
    %527 = vmatpush1.bf16.xpose.msra.mxu0 0
    %528 = vmatprep.subr.bf16.mxu0 0
    %529 = vmatpush1.bf16.xpose.msra.mxu0 0
    %530 = vmatprep.subr.bf16.mxu0 0
    %531 = vmatpush1.bf16.xpose.msra.mxu0 0
    %532 = vmatprep.subr.bf16.mxu0 0
    %533 = vmatpush1.bf16.xpose.msra.mxu0 0
    %534 = vmatprep.subr.bf16.mxu0 0
    %535 = vmatpush1.bf16.xpose.msra.mxu0 0
    %536 = vmatprep.subr.bf16.mxu0 0
    %537 = vmatpush1.bf16.xpose.msra.mxu0 0
    %538 = vmatprep.subr.bf16.mxu0 0
    %539 = vmatpush1.bf16.xpose.msra.mxu0 0
    %540 = vmatprep.mubr.bf16.mxu0 0
    %541 = vmatmul.mubr.bf16.gmra.mrb[0].mxu0 %v500
    %v542 = vpop.f32.mrb[0].mxu0
    %v543 = vadd.f32 %v286, %v542
    %v544 = vpop.f32.mrb[0].mxu0
    %v545 = vpop.f32.mrb[0].mxu0
    %v546 = vadd.f32 %v287, %v545
    %v547 = vpop.f32.mrb[0].mxu0
    %548 = vmatprep.mubr.bf16.mxu0 0
    %549 = vmatmul.mubr.bf16.gmra.mrb[0].mxu0 %v503
    %v550 = vpop.f32.mrb[0].mxu0
    %v551 = vadd.f32 %v288, %v550
    %v552 = vpop.f32.mrb[0].mxu0
    %v553 = vpop.f32.mrb[0].mxu0
    %v554 = vadd.f32 %v289, %v553
    %v555 = vpop.f32.mrb[0].mxu0
    %556 = vdwg.mxu0
    %v557 = vsel %vm354, %v543, -inf
    %558 = vmax.xlane.f32.xlu0 %v557
    %v559 = vpop.xlane.xlu0 %558
    %v560 = vsel %vm354, %v546, -inf
    %561 = vmax.xlane.f32.xlu0 %v560
    %v562 = vpop.xlane.xlu0 %561
    %v563 = vsel %vm354, %v551, -inf
    %564 = vmax.xlane.f32.xlu0 %v563
    %v565 = vpop.xlane.xlu0 %564
    %v566 = vsel %vm354, %v554, -inf
    %567 = vmax.xlane.f32.xlu0 %v566
    %v568 = vpop.xlane.xlu0 %567
    %v569 = vsub.f32 %v543, %v559
    %v570 = vsub.f32 %v546, %v562
    %v571 = vsub.f32 %v551, %v565
    %v572 = vsub.f32 %v554, %v568
    %v573 = vmul.f32 %v569, 1.442695
    %v574 = vpow.pop %v573
    %v575 = vmul.f32 %v570, 1.442695
    %v576 = vpow.pop %v575
    %v577 = vmul.f32 %v571, 1.442695
    %v578 = vpow.pop %v577
    %v579 = vmul.f32 %v572, 1.442695
    %v580 = vpow.pop %v579
    %v581 = vsel %vm354, %v574, 0.0
    %582 = vadd.xlane.f32.xlu0 %v581
    %v583 = vpop.xlane.xlu0 %582
    %v584 = vsel %vm354, %v576, 0.0
    %585 = vadd.xlane.f32.xlu0 %v584
    %v586 = vpop.xlane.xlu0 %585
    %v587 = vsel %vm354, %v578, 0.0
    %588 = vadd.xlane.f32.xlu0 %v587
    %v589 = vpop.xlane.xlu0 %588
    %v590 = vsel %vm354, %v580, 0.0
    %591 = vadd.xlane.f32.xlu0 %v590
    %v592 = vpop.xlane.xlu0 %591
    %v593 = vrcp.pop %v583
    %v594 = vmul.f32 %v574, %v593
    %v595 = vrcp.pop %v586
    %v596 = vmul.f32 %v576, %v595
    %v597 = vrcp.pop %v589
    %v598 = vmul.f32 %v578, %v597
    %v599 = vrcp.pop %v592
    %v600 = vmul.f32 %v580, %v599
    %v601 = vpack.c.bf16 %v596, %v594
    %v602 = vpack.c.bf16 %v600, %v598
    %603 = vrot.lane.b32.xlu0 %v285, 64
    %v604 = vpop.permute.xlu0 %603
    %v607 = vsel %vm354, %v601, 0
    %609 = vmatprep.subr.bf16.mxu0 0
    %610 = vmatpush1.bf16.msra.mxu0 %v604
    %611 = vmatprep.subr.bf16.mxu0 0
    %612 = vmatpush1.bf16.msra.mxu0 0
    %613 = vmatprep.subr.bf16.mxu0 0
    %614 = vmatpush1.bf16.msra.mxu0 0
    %615 = vmatprep.subr.bf16.mxu0 0
    %616 = vmatpush1.bf16.msra.mxu0 0
    %617 = vmatprep.subr.bf16.mxu0 0
    %618 = vmatpush1.bf16.msra.mxu0 0
    %619 = vmatprep.subr.bf16.mxu0 0
    %620 = vmatpush1.bf16.msra.mxu0 0
    %621 = vmatprep.subr.bf16.mxu0 0
    %622 = vmatpush1.bf16.msra.mxu0 0
    %623 = vmatprep.subr.bf16.mxu0 0
    %624 = vmatpush1.bf16.msra.mxu0 0
    %625 = vmatprep.subr.bf16.mxu0 0
    %626 = vmatpush1.bf16.msra.mxu0 0
    %627 = vmatprep.subr.bf16.mxu0 0
    %628 = vmatpush1.bf16.msra.mxu0 0
    %629 = vmatprep.subr.bf16.mxu0 0
    %630 = vmatpush1.bf16.msra.mxu0 0
    %631 = vmatprep.subr.bf16.mxu0 0
    %632 = vmatpush1.bf16.msra.mxu0 0
    %633 = vmatprep.subr.bf16.mxu0 0
    %634 = vmatpush1.bf16.msra.mxu0 0
    %635 = vmatprep.subr.bf16.mxu0 0
    %636 = vmatpush1.bf16.msra.mxu0 0
    %637 = vmatprep.subr.bf16.mxu0 0
    %638 = vmatpush1.bf16.msra.mxu0 0
    %639 = vmatprep.subr.bf16.mxu0 0
    %640 = vmatpush1.bf16.msra.mxu0 0
    %641 = vmatprep.mubr.bf16.mxu0 0
    %642 = vmatmul.mubr.bf16.gmra.mrb[0].mxu0 %v607
    %v643 = vpop.f32.mrb[0].mxu0
    %v644 = vadd.f32 0.0, %v643
    %v645 = vpop.f32.mrb[0].mxu0
    %v646 = vpop.f32.mrb[0].mxu0
    %v647 = vadd.f32 0.0, %v646
    %v648 = vpop.f32.mrb[0].mxu0
    %649 = vdwg.mxu0
    %v650 = vadd.f32 %v487, %v644
    %v651 = vadd.f32 %v490, %v647
    %652 = vrot.lane.b32.xlu0 %v285, 32
    %v653 = vpop.permute.xlu0 %652
    %v656 = vsel %vm354, %v602, 0
    %658 = vmatprep.subr.bf16.mxu0 0
    %659 = vmatpush1.bf16.msra.mxu0 %v653
    %660 = vmatprep.subr.bf16.mxu0 0
    %661 = vmatpush1.bf16.msra.mxu0 0
    %662 = vmatprep.subr.bf16.mxu0 0
    %663 = vmatpush1.bf16.msra.mxu0 0
    %664 = vmatprep.subr.bf16.mxu0 0
    %665 = vmatpush1.bf16.msra.mxu0 0
    %666 = vmatprep.subr.bf16.mxu0 0
    %667 = vmatpush1.bf16.msra.mxu0 0
    %668 = vmatprep.subr.bf16.mxu0 0
    %669 = vmatpush1.bf16.msra.mxu0 0
    %670 = vmatprep.subr.bf16.mxu0 0
    %671 = vmatpush1.bf16.msra.mxu0 0
    %672 = vmatprep.subr.bf16.mxu0 0
    %673 = vmatpush1.bf16.msra.mxu0 0
    %674 = vmatprep.subr.bf16.mxu0 0
    %675 = vmatpush1.bf16.msra.mxu0 0
    %676 = vmatprep.subr.bf16.mxu0 0
    %677 = vmatpush1.bf16.msra.mxu0 0
    %678 = vmatprep.subr.bf16.mxu0 0
    %679 = vmatpush1.bf16.msra.mxu0 0
    %680 = vmatprep.subr.bf16.mxu0 0
    %681 = vmatpush1.bf16.msra.mxu0 0
    %682 = vmatprep.subr.bf16.mxu0 0
    %683 = vmatpush1.bf16.msra.mxu0 0
    %684 = vmatprep.subr.bf16.mxu0 0
    %685 = vmatpush1.bf16.msra.mxu0 0
    %686 = vmatprep.subr.bf16.mxu0 0
    %687 = vmatpush1.bf16.msra.mxu0 0
    %688 = vmatprep.subr.bf16.mxu0 0
    %689 = vmatpush1.bf16.msra.mxu0 0
    %690 = vmatprep.mubr.bf16.mxu0 0
    %691 = vmatmul.mubr.bf16.gmra.mrb[0].mxu0 %v656
    %v692 = vpop.f32.mrb[0].mxu0
    %v693 = vadd.f32 0.0, %v692
    %v694 = vpop.f32.mrb[0].mxu0
    %v695 = vpop.f32.mrb[0].mxu0
    %v696 = vadd.f32 0.0, %v695
    %v697 = vpop.f32.mrb[0].mxu0
    %698 = vdwg.mxu0
    %v699 = vadd.f32 %v650, %v693
    %v700 = vadd.f32 %v651, %v696
    %701 = vst.msk [vmem:[#allocation10] sm:$0xff] %vm102, %v699
    %702 = vst.msk [vmem:[#allocation10 + $0x8] sm:$0xff] %vm102, %v700
    // Predicated region
    $region46: #{tpu_custom_call.1} parent=1 // pred_check
      _
    $region47: #{tpu_custom_call.1} parent=1 // pred_check_branch
      %704 = sbr.rel (0) target = $region49
    $region48: #{tpu_custom_call.1} parent=1 // pred_region
      %s706 = ssub.s32 256, 256
      %707 = vsyncadd [#allocation4], %s706
      %s708 = sshll.u32 [#allocation10], 4
      %s709 = int_to_ptr.vmem [resolvable:$true] %s708
      %714 = dma.vmem_to_hbm [thread:$0]  %s709, 256, %s7, [#allocation4], 128, 128, 8
    $region49: #{tpu_custom_call.1} parent=1 // pred_fallthru
      _
    // Predicated region
    $region50: #{tpu_custom_call.1} parent=1 // pred_check
      _
    $region51: #{tpu_custom_call.1} parent=1 // pred_check_branch
      %716 = sbr.rel (0) target = $region53
    $region52: #{tpu_custom_call.1} parent=1 // pred_region
      %717 = dma.done [#allocation4], 256
    $region53: #{tpu_custom_call.1} parent=1 // pred_fallthru
      _
    %718 = vsyncpa [#allocation3], 1
    %719 = vsyncpa [#allocation6], 1
    %720 = vsyncpa [#allocation9], 1
    %721 = vsyncpa [#allocation4], 1

</llo_original>
